<compile_context>
chip_gen: v7x
topology: tpu7x:2x2x1
jax: 0.10.0
libtpu: 0.0.40
codegen_flags: <defaults>
</compile_context>

<pallas_src>
import functools
import math

import jax
import jax.numpy as jnp
from jax.experimental import pallas as pl
from jax.experimental.pallas import tpu as pltpu


_INV_SQRT2 = 0.7071067811865476


def _round_up(a, m):
    return (a + m - 1) // m * m


def _vmem_budget_bytes():
    """Per-TensorCore VMEM budget with headroom for compiler-internal scratch."""
    cap = 64 * 1024 * 1024  # conservative default (v7x per-TC physical VMEM)
    try:
        info = pltpu.get_tpu_info()
        cap = int(getattr(info, "vmem_capacity_bytes", cap))
    except Exception:
        pass
    # ~85% of physical, capped below v5e/v6e physical 128 MiB.
    return min(int(cap * 0.85), 110 * 1024 * 1024)


# -----------------------------------------------------------------------------
# Kernel bodies
# -----------------------------------------------------------------------------
def _ffn_resident_kernel(x_ref, w1_ref, b1_ref, w2_ref, b2_ref, g_ref, be_ref,
                         o_ref, *, eps, d_in_real):
    """Weights fully VMEM-resident; grid = (row tiles,)."""
    xf = x_ref[...].astype(jnp.float32)

    # LayerNorm stats over the REAL feature width; padded lanes of x / gamma /
    # beta are zero, so plain sums are exact and padded xn lanes come out zero.
    inv_d = 1.0 / d_in_real
    mu = jnp.sum(xf, axis=-1, keepdims=True) * inv_d
    ex2 = jnp.sum(xf * xf, axis=-1, keepdims=True) * inv_d
    var = ex2 - mu * mu
    xn = (xf - mu) * jax.lax.rsqrt(var + eps)
    xn = xn * g_ref[...] + be_ref[...]

    # MXU in the weights' native dtype, f32 accumulate.
    h = jnp.dot(xn.astype(w1_ref.dtype), w1_ref[...],
                preferred_element_type=jnp.float32) + b1_ref[...]
    h = 0.5 * h * (1.0 + jax.lax.erf(h * _INV_SQRT2))          # exact GELU
    y = jnp.dot(h.astype(w2_ref.dtype), w2_ref[...],
                preferred_element_type=jnp.float32) + b2_ref[...]

    o_ref[...] = (y + xf).astype(o_ref.dtype)


def _ffn_stream_kernel(x_ref, w1_ref, b1_ref, w2_ref, b2_ref, g_ref, be_ref,
                       o_ref, xn_scr, acc_scr, *, eps, d_in_real):
    """Weights streamed over a second ("arbitrary") grid axis on d_hid."""
    k = pl.program_id(1)
    nk = pl.num_programs(1)

    @pl.when(k == 0)
    def _():
        xf = x_ref[...].astype(jnp.float32)
        inv_d = 1.0 / d_in_real
        mu = jnp.sum(xf, axis=-1, keepdims=True) * inv_d
        ex2 = jnp.sum(xf * xf, axis=-1, keepdims=True) * inv_d
        var = ex2 - mu * mu
        xn = (xf - mu) * jax.lax.rsqrt(var + eps)
        xn = xn * g_ref[...] + be_ref[...]
        xn_scr[...] = xn.astype(xn_scr.dtype)
        acc_scr[...] = jnp.zeros_like(acc_scr)

    h = jnp.dot(xn_scr[...], w1_ref[...],
                preferred_element_type=jnp.float32) + b1_ref[...]
    h = 0.5 * h * (1.0 + jax.lax.erf(h * _INV_SQRT2))
    acc_scr[...] += jnp.dot(h.astype(w2_ref.dtype), w2_ref[...],
                            preferred_element_type=jnp.float32)

    @pl.when(k == nk - 1)
    def _():
        o_ref[...] = (acc_scr[...] + b2_ref[...]
                      + x_ref[...].astype(jnp.float32)).astype(o_ref.dtype)


# -----------------------------------------------------------------------------
# Wrapper
# -----------------------------------------------------------------------------
def _pad2(a, rows, cols):
    r, c = a.shape
    if r == rows and c == cols:
        return a
    return jnp.pad(a, ((0, rows - r), (0, cols - c)))


def positionwise_feed_forward(x, w1, b1, w2, b2, gamma, beta, *, eps=1e-6,
                              tm=256, tm_stream=512, tk_hid=512,
                              weights_dtype=None, force_stream=False):
    """Fused pre-norm FFN.

    x: [B, S, d_in]; w1: [d_in, d_hid]; w2: [d_hid, d_in] (nn.Linear weights
    already transposed to input-major). Eval-mode dropout (identity).
    Optionally pass weights_dtype=jnp.bfloat16 for bf16 MXU with f32 accumulate
    (faster / half the VMEM footprint, slightly lower precision).
    """
    B, S, d_in = x.shape
    d_hid = w1.shape[1]
    N = B * S

    if weights_dtype is not None:
        w1 = w1.astype(weights_dtype)
        w2 = w2.astype(weights_dtype)

    w_itemsize = jnp.dtype(w1.dtype).itemsize
    x_itemsize = jnp.dtype(x.dtype).itemsize

    # Lane-dense feature padding (multiples of 128) for both matmul dims.
    d_in_pad = _round_up(d_in, 128)
    tk_hid = _round_up(min(tk_hid, _round_up(d_hid, 128)), 128)
    d_hid_pad = _round_up(d_hid, tk_hid)

    budget = _vmem_budget_bytes()

    def resident_fits(tm_):
        weights = 2 * d_in_pad * d_hid_pad * w_itemsize          # single-buffered
        small = (2 * d_hid_pad + 3 * d_in_pad) * 4
        io = 2 * 2 * tm_ * d_in_pad * x_itemsize                 # x/out double-buffered
        live = tm_ * d_hid_pad * 4 + 3 * tm_ * d_in_pad * 4      # h + xn/residual f32
        return weights + small + io + live <= int(budget * 0.9)

    sub = 8 if x_itemsize == 4 else 16
    stream = force_stream or not resident_fits(_round_up(tm, sub))
    tm_goal = tm_stream if stream else tm

    tm_eff = min(_round_up(tm_goal, sub), _round_up(N, sub))
    N_pad = _round_up(N, tm_eff)

    # Pad operands once in the wrapper.
    x2 = _pad2(x.reshape(N, d_in), N_pad, d_in_pad)
    w1p = _pad2(w1, d_in_pad, d_hid_pad)
    w2p = _pad2(w2, d_hid_pad, d_in_pad)
    b1p = _pad2(b1.astype(jnp.float32).reshape(1, d_hid), 1, d_hid_pad)
    b2p = _pad2(b2.astype(jnp.float32).reshape(1, d_in), 1, d_in_pad)
    gp = _pad2(gamma.astype(jnp.float32).reshape(1, d_in), 1, d_in_pad)
    bep = _pad2(beta.astype(jnp.float32).reshape(1, d_in), 1, d_in_pad)

    n_row_tiles = N_pad // tm_eff
    weight_bytes = 2 * d_in_pad * d_hid_pad * w_itemsize
    cost = pl.CostEstimate(
        flops=4 * N_pad * d_in_pad * d_hid_pad,
        transcendentals=N_pad * d_hid_pad,
        bytes_accessed=int(
            2 * N_pad * d_in_pad * x_itemsize                    # x read + out write
            + weight_bytes * (n_row_tiles if stream else 1)      # weight traffic
            + (2 * d_hid_pad + 3 * d_in_pad) * 4),               # biases/gamma/beta
    )

    def run(single_buffer_consts):
        # Constant-index blocks gain nothing from double-buffering.
        pm = dict(pipeline_mode=pl.Buffered(1)) if single_buffer_consts else {}
        if not stream:
            grid_spec = pltpu.PrefetchScalarGridSpec(
                num_scalar_prefetch=0,
                grid=(n_row_tiles,),
                in_specs=[
                    pl.BlockSpec((tm_eff, d_in_pad), lambda i: (i, 0)),        # x rows
                    pl.BlockSpec((d_in_pad, d_hid_pad), lambda i: (0, 0), **pm),  # W1
                    pl.BlockSpec((1, d_hid_pad), lambda i: (0, 0), **pm),      # b1
                    pl.BlockSpec((d_hid_pad, d_in_pad), lambda i: (0, 0), **pm),  # W2
                    pl.BlockSpec((1, d_in_pad), lambda i: (0, 0), **pm),       # b2
                    pl.BlockSpec((1, d_in_pad), lambda i: (0, 0), **pm),       # gamma
                    pl.BlockSpec((1, d_in_pad), lambda i: (0, 0), **pm),       # beta
                ],
                out_specs=pl.BlockSpec((tm_eff, d_in_pad), lambda i: (i, 0)),
            )
            kernel = functools.partial(_ffn_resident_kernel, eps=eps,
                                       d_in_real=float(d_in))
            dims = ("parallel",)
        else:
            grid_spec = pltpu.PrefetchScalarGridSpec(
                num_scalar_prefetch=0,
                grid=(n_row_tiles, d_hid_pad // tk_hid),
                in_specs=[
                    pl.BlockSpec((tm_eff, d_in_pad), lambda i, k: (i, 0)),     # x rows
                    pl.BlockSpec((d_in_pad, tk_hid), lambda i, k: (0, k)),     # W1 tile
                    pl.BlockSpec((1, tk_hid), lambda i, k: (0, k)),            # b1 tile
                    pl.BlockSpec((tk_hid, d_in_pad), lambda i, k: (k, 0)),     # W2 tile
                    pl.BlockSpec((1, d_in_pad), lambda i, k: (0, 0), **pm),    # b2
                    pl.BlockSpec((1, d_in_pad), lambda i, k: (0, 0), **pm),    # gamma
                    pl.BlockSpec((1, d_in_pad), lambda i, k: (0, 0), **pm),    # beta
                ],
                out_specs=pl.BlockSpec((tm_eff, d_in_pad), lambda i, k: (i, 0)),
                scratch_shapes=[
                    pltpu.VMEM((tm_eff, d_in_pad), w1.dtype),      # xn (LN output)
                    pltpu.VMEM((tm_eff, d_in_pad), jnp.float32),   # f32 accumulator
                ],
            )
            kernel = functools.partial(_ffn_stream_kernel, eps=eps,
                                       d_in_real=float(d_in))
            dims = ("parallel", "arbitrary")

        return pl.pallas_call(
            kernel,
            out_shape=jax.ShapeDtypeStruct((N_pad, d_in_pad), x.dtype),
            grid_spec=grid_spec,
            compiler_params=pltpu.CompilerParams(
                dimension_semantics=dims,
                vmem_limit_bytes=int(budget),
            ),
            cost_estimate=cost,
        )(x2, w1p, b1p, w2p, b2p, gp, bep)

    try:
        out = run(single_buffer_consts=True)
    except Exception:
        # Fallback if this JAX build rejects pipeline_mode=pl.Buffered(1).
        out = run(single_buffer_consts=False)

    out = out[:N, :d_in]
    return out.reshape(B, S, d_in)


# -----------------------------------------------------------------------------
# Reference + demo
# -----------------------------------------------------------------------------
def _reference(x, w1, b1, w2, b2, gamma, beta, eps=1e-6):
    xf = x.astype(jnp.float32)
    mu = jnp.mean(xf, axis=-1, keepdims=True)
    var = jnp.mean((xf - mu) ** 2, axis=-1, keepdims=True)
    xn = (xf - mu) / jnp.sqrt(var + eps) * gamma + beta
    h = jax.nn.gelu(xn @ w1.astype(jnp.float32) + b1, approximate=False)
    y = h @ w2.astype(jnp.float32) + b2
    return (y + xf).astype(x.dtype)


if __name__ == "__main__":
    key = jax.random.PRNGKey(0)

    # ---- Case 1: resident-weights path ----------------------------------
    B, S, d_in, d_hid = 2, 8, 32, 64
    kx, k1, k2, k3, k4, key = jax.random.split(key, 6)
    x = jax.random.normal(kx, (B, S, d_in), dtype=jnp.float32)
    lim1 = 1.0 / math.sqrt(d_in)
    lim2 = 1.0 / math.sqrt(d_hid)
    w1 = jax.random.uniform(k1, (d_in, d_hid), jnp.float32, -lim1, lim1)
    b1 = jax.random.uniform(k2, (d_hid,), jnp.float32, -lim1, lim1)
    w2 = jax.random.uniform(k3, (d_hid, d_in), jnp.float32, -lim2, lim2)
    b2 = jax.random.uniform(k4, (d_in,), jnp.float32, -lim2, lim2)
    gamma = jnp.ones((d_in,), jnp.float32)   # nn.LayerNorm default init
    beta = jnp.zeros((d_in,), jnp.float32)

    out = positionwise_feed_forward(x, w1, b1, w2, b2, gamma, beta)
    out = jax.block_until_ready(out)
    ref = _reference(x, w1, b1, w2, b2, gamma, beta)
    assert out.shape == (B, S, d_in)
    assert jnp.allclose(out, ref, atol=1e-4, rtol=1e-4), "resident path mismatch"

    # ---- Case 2: weight-streaming path (grid axis over d_hid) -----------
    B2, S2, d_in2, d_hid2 = 2, 8, 40, 300    # non-128-multiple dims on purpose
    kx, k1, k2, k3, k4, key = jax.random.split(key, 6)
    xb = jax.random.normal(kx, (B2, S2, d_in2), dtype=jnp.float32)
    lim1 = 1.0 / math.sqrt(d_in2)
    lim2 = 1.0 / math.sqrt(d_hid2)
    w1b = jax.random.uniform(k1, (d_in2, d_hid2), jnp.float32, -lim1, lim1)
    b1b = jax.random.uniform(k2, (d_hid2,), jnp.float32, -lim1, lim1)
    w2b = jax.random.uniform(k3, (d_hid2, d_in2), jnp.float32, -lim2, lim2)
    b2b = jax.random.uniform(k4, (d_in2,), jnp.float32, -lim2, lim2)
    gammab = jax.random.uniform(key, (d_in2,), jnp.float32, 0.5, 1.5)
    betab = jnp.zeros((d_in2,), jnp.float32)

    outb = positionwise_feed_forward(xb, w1b, b1b, w2b, b2b, gammab, betab,
                                     force_stream=True, tk_hid=128, tm_stream=64)
    outb = jax.block_until_ready(outb)
    refb = _reference(xb, w1b, b1b, w2b, b2b, gammab, betab)
    assert outb.shape == (B2, S2, d_in2)
    assert jnp.allclose(outb, refb, atol=1e-4, rtol=1e-4), "streaming path mismatch"

    print("KERNEL_OK")
</pallas_src>

<mosaic_0001>
module attributes {stable_mosaic.version = 11 : i64} {
  func.func @_ffn_resident_kernel(%arg0: i32, %arg1: memref<16x128xf32, #tpu.memory_space<vmem>>, %arg2: memref<128x128xf32, #tpu.memory_space<vmem>>, %arg3: memref<1x128xf32, #tpu.memory_space<vmem>>, %arg4: memref<128x128xf32, #tpu.memory_space<vmem>>, %arg5: memref<1x128xf32, #tpu.memory_space<vmem>>, %arg6: memref<1x128xf32, #tpu.memory_space<vmem>>, %arg7: memref<1x128xf32, #tpu.memory_space<vmem>>, %arg8: memref<16x128xf32, #tpu.memory_space<vmem>>) attributes {dimension_semantics = [#tpu.dimension_semantics<parallel>], iteration_bounds = array<i64: 1>, scalar_prefetch = 0 : i64, scratch_operands = 0 : i64, tpu.core_type = #tpu.core_type<tc>, window_params = [{transform_indices = @transform_0, window_bounds = array<i64: 16, 128>}, {pipeline_mode = #tpu.pipeline_mode<synchronous>, transform_indices = @transform_1, window_bounds = array<i64: 128, 128>}, {pipeline_mode = #tpu.pipeline_mode<synchronous>, transform_indices = @transform_2, window_bounds = array<i64: 1, 128>}, {pipeline_mode = #tpu.pipeline_mode<synchronous>, transform_indices = @transform_3, window_bounds = array<i64: 128, 128>}, {pipeline_mode = #tpu.pipeline_mode<synchronous>, transform_indices = @transform_4, window_bounds = array<i64: 1, 128>}, {pipeline_mode = #tpu.pipeline_mode<synchronous>, transform_indices = @transform_5, window_bounds = array<i64: 1, 128>}, {pipeline_mode = #tpu.pipeline_mode<synchronous>, transform_indices = @transform_6, window_bounds = array<i64: 1, 128>}, {transform_indices = @transform_7, window_bounds = array<i64: 16, 128>}]} {
    %c0 = arith.constant 0 : index
    %c0_0 = arith.constant 0 : index
    %0 = vector.load %arg1[%c0, %c0_0] : memref<16x128xf32, #tpu.memory_space<vmem>>, vector<16x128xf32>
    %cst = arith.constant dense<0.000000e+00> : vector<16xf32>
    %1 = vector.multi_reduction <add>, %0, %cst [1] : vector<16x128xf32> to vector<16xf32>
    %2 = vector.shape_cast %1 : vector<16xf32> to vector<16x1xf32>
    %cst_1 = arith.constant 3.125000e-02 : f32
    %3 = vector.broadcast %cst_1 : f32 to vector<16x1xf32>
    %4 = arith.mulf %2, %3 : vector<16x1xf32>
    %5 = arith.mulf %0, %0 : vector<16x128xf32>
    %cst_2 = arith.constant dense<0.000000e+00> : vector<16xf32>
    %6 = vector.multi_reduction <add>, %5, %cst_2 [1] : vector<16x128xf32> to vector<16xf32>
    %7 = vector.shape_cast %6 : vector<16xf32> to vector<16x1xf32>
    %cst_3 = arith.constant 3.125000e-02 : f32
    %8 = vector.broadcast %cst_3 : f32 to vector<16x1xf32>
    %9 = arith.mulf %7, %8 : vector<16x1xf32>
    %10 = arith.mulf %4, %4 : vector<16x1xf32>
    %11 = arith.subf %9, %10 : vector<16x1xf32>
    %12 = vector.broadcast %4 : vector<16x1xf32> to vector<16x128xf32>
    %13 = arith.subf %0, %12 : vector<16x128xf32>
    %cst_4 = arith.constant 9.99999997E-7 : f32
    %14 = vector.broadcast %cst_4 : f32 to vector<16x1xf32>
    %15 = arith.addf %11, %14 : vector<16x1xf32>
    %16 = math.rsqrt %15 : vector<16x1xf32>
    %17 = vector.broadcast %16 : vector<16x1xf32> to vector<16x128xf32>
    %18 = arith.mulf %13, %17 : vector<16x128xf32>
    %c0_5 = arith.constant 0 : index
    %c0_6 = arith.constant 0 : index
    %19 = vector.load %arg6[%c0_5, %c0_6] : memref<1x128xf32, #tpu.memory_space<vmem>>, vector<1x128xf32>
    %20 = vector.broadcast %19 : vector<1x128xf32> to vector<16x128xf32>
    %21 = arith.mulf %18, %20 : vector<16x128xf32>
    %c0_7 = arith.constant 0 : index
    %c0_8 = arith.constant 0 : index
    %22 = vector.load %arg7[%c0_7, %c0_8] : memref<1x128xf32, #tpu.memory_space<vmem>>, vector<1x128xf32>
    %23 = vector.broadcast %22 : vector<1x128xf32> to vector<16x128xf32>
    %24 = arith.addf %21, %23 : vector<16x128xf32>
    %c0_9 = arith.constant 0 : index
    %c0_10 = arith.constant 0 : index
    %25 = vector.load %arg2[%c0_9, %c0_10] : memref<128x128xf32, #tpu.memory_space<vmem>>, vector<128x128xf32>
    %cst_11 = arith.constant dense<0.000000e+00> : vector<16x128xf32>
    %26 = tpu.matmul %24, %25, %cst_11 {dimension_numbers = #tpu.dot_dimension_numbers<[1], [0], [0], [1], [0, 0, 1, 1], [], []>} : vector<16x128xf32>, vector<128x128xf32>, vector<16x128xf32> -> vector<16x128xf32>
    %c0_12 = arith.constant 0 : index
    %c0_13 = arith.constant 0 : index
    %27 = vector.load %arg3[%c0_12, %c0_13] : memref<1x128xf32, #tpu.memory_space<vmem>>, vector<1x128xf32>
    %28 = vector.broadcast %27 : vector<1x128xf32> to vector<16x128xf32>
    %29 = arith.addf %26, %28 : vector<16x128xf32>
    %cst_14 = arith.constant 5.000000e-01 : f32
    %30 = vector.broadcast %cst_14 : f32 to vector<16x128xf32>
    %31 = arith.mulf %30, %29 : vector<16x128xf32>
    %cst_15 = arith.constant 0.707106769 : f32
    %32 = vector.broadcast %cst_15 : f32 to vector<16x128xf32>
    %33 = arith.mulf %29, %32 : vector<16x128xf32>
    %34 = math.erf %33 : vector<16x128xf32>
    %cst_16 = arith.constant 1.000000e+00 : f32
    %35 = vector.broadcast %cst_16 : f32 to vector<16x128xf32>
    %36 = arith.addf %35, %34 : vector<16x128xf32>
    %37 = arith.mulf %31, %36 : vector<16x128xf32>
    %c0_17 = arith.constant 0 : index
    %c0_18 = arith.constant 0 : index
    %38 = vector.load %arg4[%c0_17, %c0_18] : memref<128x128xf32, #tpu.memory_space<vmem>>, vector<128x128xf32>
    %cst_19 = arith.constant dense<0.000000e+00> : vector<16x128xf32>
    %39 = tpu.matmul %37, %38, %cst_19 {dimension_numbers = #tpu.dot_dimension_numbers<[1], [0], [0], [1], [0, 0, 1, 1], [], []>} : vector<16x128xf32>, vector<128x128xf32>, vector<16x128xf32> -> vector<16x128xf32>
    %c0_20 = arith.constant 0 : index
    %c0_21 = arith.constant 0 : index
    %40 = vector.load %arg5[%c0_20, %c0_21] : memref<1x128xf32, #tpu.memory_space<vmem>>, vector<1x128xf32>
    %41 = vector.broadcast %40 : vector<1x128xf32> to vector<16x128xf32>
    %42 = arith.addf %39, %41 : vector<16x128xf32>
    %43 = arith.addf %42, %0 : vector<16x128xf32>
    %c0_22 = arith.constant 0 : index
    %c0_23 = arith.constant 0 : index
    %44 = vector.load %arg8[%c0_22, %c0_23] : memref<16x128xf32, #tpu.memory_space<vmem>>, vector<16x128xf32>
    tpu.vector_store %arg8[%c0_22, %c0_23], %43 {strides = array<i32>} : memref<16x128xf32, #tpu.memory_space<vmem>>, vector<16x128xf32>,
    return
  }
  func.func @transform_0(%arg0: i32) -> (i32, i32) {
    %c0_i32 = arith.constant 0 : i32
    %c0_i32_0 = arith.constant 0 : i32
    return %arg0, %c0_i32 : i32, i32
  }
  func.func @transform_1(%arg0: i32) -> (i32, i32) {
    %c0_i32 = arith.constant 0 : i32
    %c0_i32_0 = arith.constant 0 : i32
    %c0_i32_1 = arith.constant 0 : i32
    return %c0_i32, %c0_i32_0 : i32, i32
  }
  func.func @transform_2(%arg0: i32) -> (i32, i32) {
    %c0_i32 = arith.constant 0 : i32
    %c0_i32_0 = arith.constant 0 : i32
    %c0_i32_1 = arith.constant 0 : i32
    return %c0_i32, %c0_i32_0 : i32, i32
  }
  func.func @transform_3(%arg0: i32) -> (i32, i32) {
    %c0_i32 = arith.constant 0 : i32
    %c0_i32_0 = arith.constant 0 : i32
    %c0_i32_1 = arith.constant 0 : i32
    return %c0_i32, %c0_i32_0 : i32, i32
  }
  func.func @transform_4(%arg0: i32) -> (i32, i32) {
    %c0_i32 = arith.constant 0 : i32
    %c0_i32_0 = arith.constant 0 : i32
    %c0_i32_1 = arith.constant 0 : i32
    return %c0_i32, %c0_i32_0 : i32, i32
  }
  func.func @transform_5(%arg0: i32) -> (i32, i32) {
    %c0_i32 = arith.constant 0 : i32
    %c0_i32_0 = arith.constant 0 : i32
    %c0_i32_1 = arith.constant 0 : i32
    return %c0_i32, %c0_i32_0 : i32, i32
  }
  func.func @transform_6(%arg0: i32) -> (i32, i32) {
    %c0_i32 = arith.constant 0 : i32
    %c0_i32_0 = arith.constant 0 : i32
    %c0_i32_1 = arith.constant 0 : i32
    return %c0_i32, %c0_i32_0 : i32, i32
  }
  func.func @transform_7(%arg0: i32) -> (i32, i32) {
    %c0_i32 = arith.constant 0 : i32
    %c0_i32_0 = arith.constant 0 : i32
    return %arg0, %c0_i32 : i32, i32
  }
}

module attributes {stable_mosaic.version = 11 : i64} {
  func.func @_ffn_resident_kernel(%arg0: i32, %arg1: memref<16x128xf32, #tpu.memory_space<vmem>>, %arg2: memref<128x128xf32, #tpu.memory_space<vmem>>, %arg3: memref<1x128xf32, #tpu.memory_space<vmem>>, %arg4: memref<128x128xf32, #tpu.memory_space<vmem>>, %arg5: memref<1x128xf32, #tpu.memory_space<vmem>>, %arg6: memref<1x128xf32, #tpu.memory_space<vmem>>, %arg7: memref<1x128xf32, #tpu.memory_space<vmem>>, %arg8: memref<16x128xf32, #tpu.memory_space<vmem>>) attributes {dimension_semantics = [#tpu.dimension_semantics<parallel>], iteration_bounds = array<i64: 1>, scalar_prefetch = 0 : i64, scratch_operands = 0 : i64, tpu.core_type = #tpu.core_type<tc>, window_params = [{transform_indices = @transform_0, window_bounds = array<i64: 16, 128>}, {pipeline_mode = #tpu.pipeline_mode<synchronous>, transform_indices = @transform_1, window_bounds = array<i64: 128, 128>}, {pipeline_mode = #tpu.pipeline_mode<synchronous>, transform_indices = @transform_2, window_bounds = array<i64: 1, 128>}, {pipeline_mode = #tpu.pipeline_mode<synchronous>, transform_indices = @transform_3, window_bounds = array<i64: 128, 128>}, {pipeline_mode = #tpu.pipeline_mode<synchronous>, transform_indices = @transform_4, window_bounds = array<i64: 1, 128>}, {pipeline_mode = #tpu.pipeline_mode<synchronous>, transform_indices = @transform_5, window_bounds = array<i64: 1, 128>}, {pipeline_mode = #tpu.pipeline_mode<synchronous>, transform_indices = @transform_6, window_bounds = array<i64: 1, 128>}, {transform_indices = @transform_7, window_bounds = array<i64: 16, 128>}]} {
    %c0 = arith.constant 0 : index
    %c0_0 = arith.constant 0 : index
    %0 = vector.load %arg1[%c0, %c0_0] : memref<16x128xf32, #tpu.memory_space<vmem>>, vector<16x128xf32>
    %cst = arith.constant dense<0.000000e+00> : vector<16xf32>
    %1 = vector.multi_reduction <add>, %0, %cst [1] : vector<16x128xf32> to vector<16xf32>
    %2 = vector.shape_cast %1 : vector<16xf32> to vector<16x1xf32>
    %cst_1 = arith.constant 3.125000e-02 : f32
    %3 = vector.broadcast %cst_1 : f32 to vector<16x1xf32>
    %4 = arith.mulf %2, %3 : vector<16x1xf32>
    %5 = arith.mulf %0, %0 : vector<16x128xf32>
    %cst_2 = arith.constant dense<0.000000e+00> : vector<16xf32>
    %6 = vector.multi_reduction <add>, %5, %cst_2 [1] : vector<16x128xf32> to vector<16xf32>
    %7 = vector.shape_cast %6 : vector<16xf32> to vector<16x1xf32>
    %cst_3 = arith.constant 3.125000e-02 : f32
    %8 = vector.broadcast %cst_3 : f32 to vector<16x1xf32>
    %9 = arith.mulf %7, %8 : vector<16x1xf32>
    %10 = arith.mulf %4, %4 : vector<16x1xf32>
    %11 = arith.subf %9, %10 : vector<16x1xf32>
    %12 = vector.broadcast %4 : vector<16x1xf32> to vector<16x128xf32>
    %13 = arith.subf %0, %12 : vector<16x128xf32>
    %cst_4 = arith.constant 9.99999997E-7 : f32
    %14 = vector.broadcast %cst_4 : f32 to vector<16x1xf32>
    %15 = arith.addf %11, %14 : vector<16x1xf32>
    %16 = math.rsqrt %15 : vector<16x1xf32>
    %17 = vector.broadcast %16 : vector<16x1xf32> to vector<16x128xf32>
    %18 = arith.mulf %13, %17 : vector<16x128xf32>
    %c0_5 = arith.constant 0 : index
    %c0_6 = arith.constant 0 : index
    %19 = vector.load %arg6[%c0_5, %c0_6] : memref<1x128xf32, #tpu.memory_space<vmem>>, vector<1x128xf32>
    %20 = vector.broadcast %19 : vector<1x128xf32> to vector<16x128xf32>
    %21 = arith.mulf %18, %20 : vector<16x128xf32>
    %c0_7 = arith.constant 0 : index
    %c0_8 = arith.constant 0 : index
    %22 = vector.load %arg7[%c0_7, %c0_8] : memref<1x128xf32, #tpu.memory_space<vmem>>, vector<1x128xf32>
    %23 = vector.broadcast %22 : vector<1x128xf32> to vector<16x128xf32>
    %24 = arith.addf %21, %23 : vector<16x128xf32>
    %c0_9 = arith.constant 0 : index
    %c0_10 = arith.constant 0 : index
    %25 = vector.load %arg2[%c0_9, %c0_10] : memref<128x128xf32, #tpu.memory_space<vmem>>, vector<128x128xf32>
    %cst_11 = arith.constant dense<0.000000e+00> : vector<16x128xf32>
    %26 = tpu.matmul %24, %25, %cst_11 {dimension_numbers = #tpu.dot_dimension_numbers<[1], [0], [0], [1], [0, 0, 1, 1], [], []>} : vector<16x128xf32>, vector<128x128xf32>, vector<16x128xf32> -> vector<16x128xf32>
    %c0_12 = arith.constant 0 : index
    %c0_13 = arith.constant 0 : index
    %27 = vector.load %arg3[%c0_12, %c0_13] : memref<1x128xf32, #tpu.memory_space<vmem>>, vector<1x128xf32>
    %28 = vector.broadcast %27 : vector<1x128xf32> to vector<16x128xf32>
    %29 = arith.addf %26, %28 : vector<16x128xf32>
    %cst_14 = arith.constant 5.000000e-01 : f32
    %30 = vector.broadcast %cst_14 : f32 to vector<16x128xf32>
    %31 = arith.mulf %30, %29 : vector<16x128xf32>
    %cst_15 = arith.constant 0.707106769 : f32
    %32 = vector.broadcast %cst_15 : f32 to vector<16x128xf32>
    %33 = arith.mulf %29, %32 : vector<16x128xf32>
    %34 = math.erf %33 : vector<16x128xf32>
    %cst_16 = arith.constant 1.000000e+00 : f32
    %35 = vector.broadcast %cst_16 : f32 to vector<16x128xf32>
    %36 = arith.addf %35, %34 : vector<16x128xf32>
    %37 = arith.mulf %31, %36 : vector<16x128xf32>
    %c0_17 = arith.constant 0 : index
    %c0_18 = arith.constant 0 : index
    %38 = vector.load %arg4[%c0_17, %c0_18] : memref<128x128xf32, #tpu.memory_space<vmem>>, vector<128x128xf32>
    %cst_19 = arith.constant dense<0.000000e+00> : vector<16x128xf32>
    %39 = tpu.matmul %37, %38, %cst_19 {dimension_numbers = #tpu.dot_dimension_numbers<[1], [0], [0], [1], [0, 0, 1, 1], [], []>} : vector<16x128xf32>, vector<128x128xf32>, vector<16x128xf32> -> vector<16x128xf32>
    %c0_20 = arith.constant 0 : index
    %c0_21 = arith.constant 0 : index
    %40 = vector.load %arg5[%c0_20, %c0_21] : memref<1x128xf32, #tpu.memory_space<vmem>>, vector<1x128xf32>
    %41 = vector.broadcast %40 : vector<1x128xf32> to vector<16x128xf32>
    %42 = arith.addf %39, %41 : vector<16x128xf32>
    %43 = arith.addf %42, %0 : vector<16x128xf32>
    %c0_22 = arith.constant 0 : index
    %c0_23 = arith.constant 0 : index
    %44 = vector.load %arg8[%c0_22, %c0_23] : memref<16x128xf32, #tpu.memory_space<vmem>>, vector<16x128xf32>
    tpu.vector_store %arg8[%c0_22, %c0_23], %43 {strides = array<i32>} : memref<16x128xf32, #tpu.memory_space<vmem>>, vector<16x128xf32>,
    return
  }
  func.func @transform_0(%arg0: i32) -> (i32, i32) {
    %c0_i32 = arith.constant 0 : i32
    %c0_i32_0 = arith.constant 0 : i32
    return %arg0, %c0_i32 : i32, i32
  }
  func.func @transform_1(%arg0: i32) -> (i32, i32) {
    %c0_i32 = arith.constant 0 : i32
    %c0_i32_0 = arith.constant 0 : i32
    %c0_i32_1 = arith.constant 0 : i32
    return %c0_i32, %c0_i32_0 : i32, i32
  }
  func.func @transform_2(%arg0: i32) -> (i32, i32) {
    %c0_i32 = arith.constant 0 : i32
    %c0_i32_0 = arith.constant 0 : i32
    %c0_i32_1 = arith.constant 0 : i32
    return %c0_i32, %c0_i32_0 : i32, i32
  }
  func.func @transform_3(%arg0: i32) -> (i32, i32) {
    %c0_i32 = arith.constant 0 : i32
    %c0_i32_0 = arith.constant 0 : i32
    %c0_i32_1 = arith.constant 0 : i32
    return %c0_i32, %c0_i32_0 : i32, i32
  }
  func.func @transform_4(%arg0: i32) -> (i32, i32) {
    %c0_i32 = arith.constant 0 : i32
    %c0_i32_0 = arith.constant 0 : i32
    %c0_i32_1 = arith.constant 0 : i32
    return %c0_i32, %c0_i32_0 : i32, i32
  }
  func.func @transform_5(%arg0: i32) -> (i32, i32) {
    %c0_i32 = arith.constant 0 : i32
    %c0_i32_0 = arith.constant 0 : i32
    %c0_i32_1 = arith.constant 0 : i32
    return %c0_i32, %c0_i32_0 : i32, i32
  }
  func.func @transform_6(%arg0: i32) -> (i32, i32) {
    %c0_i32 = arith.constant 0 : i32
    %c0_i32_0 = arith.constant 0 : i32
    %c0_i32_1 = arith.constant 0 : i32
    return %c0_i32, %c0_i32_0 : i32, i32
  }
  func.func @transform_7(%arg0: i32) -> (i32, i32) {
    %c0_i32 = arith.constant 0 : i32
    %c0_i32_0 = arith.constant 0 : i32
    return %arg0, %c0_i32 : i32, i32
  }
}

</mosaic_0001>

<llo_original>
// kernel: tpu_custom_call.1
$region0: #{tpu_custom_call.1}
  #allocation0 [shape = 'u32[]', space=smem, size = 0x4, offset = 0x4, fixed_abs, tag = 'smem constant byte address 0x4 - core index']
  #allocation1 [shape = 'u32[144,128]{1,0:T(1,128)}', space=vmem, size = 0x12000, scoped, tag = 'internal scratch']
  %s0 = inlined_call_operand.hbm [shape: f32[16,128], index: 0, kind: input, shape index: {}]
  %s1 = inlined_call_operand.hbm [shape: f32[128,128], index: 1, kind: input, shape index: {}]
  %s2 = inlined_call_operand.vmem [shape: f32[1,128], index: 2, kind: input, shape index: {}]
  %s3 = inlined_call_operand.hbm [shape: f32[128,128], index: 3, kind: input, shape index: {}]
  %s4 = inlined_call_operand.vmem [shape: f32[1,128], index: 4, kind: input, shape index: {}]
  %s5 = inlined_call_operand.vmem [shape: f32[1,128], index: 5, kind: input, shape index: {}]
  %s6 = inlined_call_operand.vmem [shape: f32[1,128], index: 6, kind: input, shape index: {}]
  %s7 = inlined_call_operand.hbm [shape: f32[16,128], index: 7, kind: output, shape index: {}]
  %s8 = sld [smem:[#allocation0]]
  $region50: #{tpu_custom_call.1} parent=0
    _
  %s10 = ssub.s32 1, %s8
  %s11 = scalar_select 0, %s10, %s8
  $region1: #{tpu_custom_call.1} parent=0
    #allocation2 [shape = 'u8[8192]{0}', space=vmem, size = 0x2000, scoped, tag = 'input window, operand 0, single buffered']
    #allocation3 [shape = 's32[1]{0}', space=sflag, size = 0x4, scoped, tag = 'scoped memory for tpu_custom_call.1']
    #allocation4 [shape = 's32[1]{0}', space=sflag, size = 0x4, scoped, tag = 'scoped memory for tpu_custom_call.1']
    #allocation5 [shape = 'u8[65536]{0}', space=vmem, size = 0x10000, scoped, tag = 'input window, operand 1, single buffered']
    #allocation6 [shape = 's32[1]{0}', space=sflag, size = 0x4, scoped, tag = 'scoped memory for tpu_custom_call.1']
    #allocation7 [shape = 'u8[65536]{0}', space=vmem, size = 0x10000, scoped, tag = 'input window, operand 3, single buffered']
    #allocation8 [shape = 'u8[8192]{0}', space=vmem, size = 0x2000, scoped, tag = 'output window, operand 0, single buffered']
    %12 = vsyncpa [#allocation3], 0
    %13 = vsyncpa [#allocation6], 0
    %14 = vsyncpa [#allocation4], 0
    // Predicated region
    $region2: #{tpu_custom_call.1} parent=1 // pred_check
      _
    $region3: #{tpu_custom_call.1} parent=1 // pred_check_branch
      %16 = sbr.rel (0) target = $region5
    $region4: #{tpu_custom_call.1} parent=1 // pred_region
      %s18 = ssub.s32 256, 256
      %19 = vsyncadd [#allocation3], %s18
      %s20 = sshll.u32 [#allocation2], 4
      %s21 = int_to_ptr.vmem [resolvable:$true] %s20
      %26 = dma.hbm_to_vmem [thread:$0]  %s0, 256, %s21, [#allocation3], 128, 128, 8
    $region5: #{tpu_custom_call.1} parent=1 // pred_fallthru
      _
    // Predicated region
    $region6: #{tpu_custom_call.1} parent=1 // pred_check
      _
    $region7: #{tpu_custom_call.1} parent=1 // pred_check_branch
      %28 = sbr.rel (0) target = $region9
    $region8: #{tpu_custom_call.1} parent=1 // pred_region
      %s30 = ssub.s32 2048, 2048
      %31 = vsyncadd [#allocation6], %s30
      %s32 = sshll.u32 [#allocation5], 4
      %s33 = int_to_ptr.vmem [resolvable:$true] %s32
      %38 = dma.hbm_to_vmem [thread:$0]  %s1, 2048, %s33, [#allocation6], 128, 128, 8
    $region9: #{tpu_custom_call.1} parent=1 // pred_fallthru
      _
    // Predicated region
    $region10: #{tpu_custom_call.1} parent=1 // pred_check
      _
    $region11: #{tpu_custom_call.1} parent=1 // pred_check_branch
      %40 = sbr.rel (0) target = $region13
    $region12: #{tpu_custom_call.1} parent=1 // pred_region
      _
    $region13: #{tpu_custom_call.1} parent=1 // pred_fallthru
      _
    // Predicated region
    $region14: #{tpu_custom_call.1} parent=1 // pred_check
      _
    $region15: #{tpu_custom_call.1} parent=1 // pred_check_branch
      %42 = sbr.rel (0) target = $region17
    $region16: #{tpu_custom_call.1} parent=1 // pred_region
      %s44 = ssub.s32 2048, 2048
      %45 = vsyncadd [#allocation6], %s44
      %s46 = sshll.u32 [#allocation7], 4
      %s47 = int_to_ptr.vmem [resolvable:$true] %s46
      %52 = dma.hbm_to_vmem [thread:$0]  %s3, 2048, %s47, [#allocation6], 128, 128, 8
    $region17: #{tpu_custom_call.1} parent=1 // pred_fallthru
      _
    // Predicated region
    $region18: #{tpu_custom_call.1} parent=1 // pred_check
      _
    $region19: #{tpu_custom_call.1} parent=1 // pred_check_branch
      %54 = sbr.rel (0) target = $region21
    $region20: #{tpu_custom_call.1} parent=1 // pred_region
      _
    $region21: #{tpu_custom_call.1} parent=1 // pred_fallthru
      _
    // Predicated region
    $region22: #{tpu_custom_call.1} parent=1 // pred_check
      _
    $region23: #{tpu_custom_call.1} parent=1 // pred_check_branch
      %56 = sbr.rel (0) target = $region25
    $region24: #{tpu_custom_call.1} parent=1 // pred_region
      _
    $region25: #{tpu_custom_call.1} parent=1 // pred_fallthru
      _
    // Predicated region
    $region26: #{tpu_custom_call.1} parent=1 // pred_check
      _
    $region27: #{tpu_custom_call.1} parent=1 // pred_check_branch
      %58 = sbr.rel (0) target = $region29
    $region28: #{tpu_custom_call.1} parent=1 // pred_region
      _
    $region29: #{tpu_custom_call.1} parent=1 // pred_fallthru
      _
    // Predicated region
    $region30: #{tpu_custom_call.1} parent=1 // pred_check
      _
    $region31: #{tpu_custom_call.1} parent=1 // pred_check_branch
      %60 = sbr.rel (0) target = $region33
    $region32: #{tpu_custom_call.1} parent=1 // pred_region
      %61 = dma.done [#allocation3], 256
    $region33: #{tpu_custom_call.1} parent=1 // pred_fallthru
      _
    // Predicated region
    $region34: #{tpu_custom_call.1} parent=1 // pred_check
      _
    $region35: #{tpu_custom_call.1} parent=1 // pred_check_branch
      %63 = sbr.rel (0) target = $region37
    $region36: #{tpu_custom_call.1} parent=1 // pred_region
      %64 = dma.done [#allocation6], 2048
    $region37: #{tpu_custom_call.1} parent=1 // pred_fallthru
      _
    // Predicated region
    $region38: #{tpu_custom_call.1} parent=1 // pred_check
      _
    $region39: #{tpu_custom_call.1} parent=1 // pred_check_branch
      %66 = sbr.rel (0) target = $region41
    $region40: #{tpu_custom_call.1} parent=1 // pred_region
      %67 = dma.done [#allocation6], 2048
    $region41: #{tpu_custom_call.1} parent=1 // pred_fallthru
      _
    %v68 = vld [vmem:[#allocation2] sm:$0xff]
    %v69 = vld [vmem:[#allocation2 + $0x8] sm:$0xff]
    %70 = vadd.xlane.f32.xlu0 %v68
    %v71 = vpop.xlane.xlu0 %70
    %72 = vadd.xlane.f32.xlu0 %v69
    %v73 = vpop.xlane.xlu0 %72
    %v74 = vmul.f32 %v71, 0.03125
    %v75 = vmul.f32 %v73, 0.03125
    %v76 = vmul.f32 %v68, %v68
    %v77 = vmul.f32 %v69, %v69
    %78 = vadd.xlane.f32.xlu0 %v76
    %v79 = vpop.xlane.xlu0 %78
    %80 = vadd.xlane.f32.xlu0 %v77
    %v81 = vpop.xlane.xlu0 %80
    %v82 = vmul.f32 %v79, 0.03125
    %v83 = vmul.f32 %v81, 0.03125
    %v84 = vmul.f32 %v74, %v74
    %v85 = vmul.f32 %v75, %v75
    %v86 = vsub.f32 %v82, %v84
    %v87 = vsub.f32 %v83, %v85
    %v88 = vsub.f32 %v68, %v74
    %v89 = vsub.f32 %v69, %v75
    %v90 = vadd.f32 %v86, 1e-06
    %v91 = vadd.f32 %v87, 1e-06
    %v92 = vrsqrt.pop %v90
    %v93 = vrsqrt.pop %v91
    %v94 = vmul.f32 %v88, %v92
    %v95 = vmul.f32 %v89, %v93
    %v96 = vld [vmem:[%s5] sm:$0x1]
    %v98 = vlaneseq
    %v99 = vshrl.u32 %v98, 7
    %v100 = vsub.s32 0, %v99
    %v101 = vrot.slane %v96, %v100
    %v103 = vmul.f32 %v94, %v101
    %v104 = vmul.f32 %v95, %v101
    %v105 = vld [vmem:[%s6] sm:$0x1]
    %v107 = vlaneseq
    %v108 = vshrl.u32 %v107, 7
    %v109 = vsub.s32 0, %v108
    %v110 = vrot.slane %v105, %v109
    %v112 = vadd.f32 %v103, %v110
    %v113 = vadd.f32 %v104, %v110
    %v114 = vld [vmem:[#allocation5] sm:$0xff]
    %v115 = vld [vmem:[#allocation5 + $0x8] sm:$0xff]
    %v116 = vld [vmem:[#allocation5 + $0x10] sm:$0xff]
    %v117 = vld [vmem:[#allocation5 + $0x18] sm:$0xff]
    %v118 = vld [vmem:[#allocation5 + $0x20] sm:$0xff]
    %v119 = vld [vmem:[#allocation5 + $0x28] sm:$0xff]
    %v120 = vld [vmem:[#allocation5 + $0x30] sm:$0xff]
    %v121 = vld [vmem:[#allocation5 + $0x38] sm:$0xff]
    %v122 = vld [vmem:[#allocation5 + $0x40] sm:$0xff]
    %v123 = vld [vmem:[#allocation5 + $0x48] sm:$0xff]
    %v124 = vld [vmem:[#allocation5 + $0x50] sm:$0xff]
    %v125 = vld [vmem:[#allocation5 + $0x58] sm:$0xff]
    %v126 = vld [vmem:[#allocation5 + $0x60] sm:$0xff]
    %v127 = vld [vmem:[#allocation5 + $0x68] sm:$0xff]
    %v128 = vld [vmem:[#allocation5 + $0x70] sm:$0xff]
    %v129 = vld [vmem:[#allocation5 + $0x78] sm:$0xff]
    %v130 = vld [vmem:[%s2] sm:$0x1]
    %v132 = vlaneseq
    %v133 = vshrl.u32 %v132, 7
    %v134 = vsub.s32 0, %v133
    %v135 = vrot.slane %v130, %v134
    %137 = vmatprep.subr.mxu0 0.0
    %138 = vmatpush1.msra.mxu0 %v114
    %139 = vmatprep.subr.mxu0 0.0
    %140 = vmatpush1.msra.mxu0 %v115
    %141 = vmatprep.subr.mxu0 0.0
    %142 = vmatpush1.msra.mxu0 %v116
    %143 = vmatprep.subr.mxu0 0.0
    %144 = vmatpush1.msra.mxu0 %v117
    %145 = vmatprep.subr.mxu0 0.0
    %146 = vmatpush1.msra.mxu0 %v118
    %147 = vmatprep.subr.mxu0 0.0
    %148 = vmatpush1.msra.mxu0 %v119
    %149 = vmatprep.subr.mxu0 0.0
    %150 = vmatpush1.msra.mxu0 %v120
    %151 = vmatprep.subr.mxu0 0.0
    %152 = vmatpush1.msra.mxu0 %v121
    %153 = vmatprep.subr.mxu0 0.0
    %154 = vmatpush1.msra.mxu0 %v122
    %155 = vmatprep.subr.mxu0 0.0
    %156 = vmatpush1.msra.mxu0 %v123
    %157 = vmatprep.subr.mxu0 0.0
    %158 = vmatpush1.msra.mxu0 %v124
    %159 = vmatprep.subr.mxu0 0.0
    %160 = vmatpush1.msra.mxu0 %v125
    %161 = vmatprep.subr.mxu0 0.0
    %162 = vmatpush1.msra.mxu0 %v126
    %163 = vmatprep.subr.mxu0 0.0
    %164 = vmatpush1.msra.mxu0 %v127
    %165 = vmatprep.subr.mxu0 0.0
    %166 = vmatpush1.msra.mxu0 %v128
    %167 = vmatprep.subr.mxu0 0.0
    %168 = vmatpush1.msra.mxu0 %v129
    %169 = vmatprep.subr.mxu0 0.0
    %170 = vmatpush1.msra.mxu0 0.0
    %171 = vmatprep.subr.mxu0 0.0
    %172 = vmatpush1.msra.mxu0 0.0
    %173 = vmatprep.subr.mxu0 0.0
    %174 = vmatpush1.msra.mxu0 0.0
    %175 = vmatprep.subr.mxu0 0.0
    %176 = vmatpush1.msra.mxu0 0.0
    %177 = vmatprep.subr.mxu0 0.0
    %178 = vmatpush1.msra.mxu0 0.0
    %179 = vmatprep.subr.mxu0 0.0
    %180 = vmatpush1.msra.mxu0 0.0
    %181 = vmatprep.subr.mxu0 0.0
    %182 = vmatpush1.msra.mxu0 0.0
    %183 = vmatprep.subr.mxu0 0.0
    %184 = vmatpush1.msra.mxu0 0.0
    %185 = vmatprep.subr.mxu0 0.0
    %186 = vmatpush1.msra.mxu0 0.0
    %187 = vmatprep.subr.mxu0 0.0
    %188 = vmatpush1.msra.mxu0 0.0
    %189 = vmatprep.subr.mxu0 0.0
    %190 = vmatpush1.msra.mxu0 0.0
    %191 = vmatprep.subr.mxu0 0.0
    %192 = vmatpush1.msra.mxu0 0.0
    %193 = vmatprep.subr.mxu0 0.0
    %194 = vmatpush1.msra.mxu0 0.0
    %195 = vmatprep.subr.mxu0 0.0
    %196 = vmatpush1.msra.mxu0 0.0
    %197 = vmatprep.subr.mxu0 0.0
    %198 = vmatpush1.msra.mxu0 0.0
    %199 = vmatprep.subr.mxu0 0.0
    %200 = vmatpush1.msra.mxu0 0.0
    %201 = vmatprep.mubr.f32.mxu0 0.0
    %202 = vmatmul.mubr.f32.gmra.mrb[0].mxu0 %v112
    %v203 = vpop.f32.mrb[0].mxu0
    %v204 = vadd.f32 %v135, %v203
    %v205 = vpop.f32.mrb[0].mxu0
    %206 = vmatprep.mubr.f32.mxu0 0.0
    %207 = vmatmul.mubr.f32.gmra.mrb[0].mxu0 %v113
    %v208 = vpop.f32.mrb[0].mxu0
    %v209 = vadd.f32 %v135, %v208
    %v210 = vpop.f32.mrb[0].mxu0
    %211 = vdwg.mxu0
    %v212 = vmul.f32 %v204, 0.5
    %v213 = vmul.f32 %v209, 0.5
    %v214 = vmul.f32 %v204, 0.70710677
    %v215 = vmul.f32 %v209, 0.70710677
    %v216 = verf.f32.pop %v214
    %v217 = verf.f32.pop %v215
    %v218 = vadd.f32 %v216, 1.0
    %v219 = vadd.f32 %v217, 1.0
    %v220 = vmul.f32 %v212, %v218
    %v221 = vmul.f32 %v213, %v219
    %v222 = vld [vmem:[#allocation7] sm:$0xff]
    %v223 = vld [vmem:[#allocation7 + $0x8] sm:$0xff]
    %v224 = vld [vmem:[#allocation7 + $0x10] sm:$0xff]
    %v225 = vld [vmem:[#allocation7 + $0x18] sm:$0xff]
    %v226 = vld [vmem:[#allocation7 + $0x20] sm:$0xff]
    %v227 = vld [vmem:[#allocation7 + $0x28] sm:$0xff]
    %v228 = vld [vmem:[#allocation7 + $0x30] sm:$0xff]
    %v229 = vld [vmem:[#allocation7 + $0x38] sm:$0xff]
    %v230 = vld [vmem:[#allocation7 + $0x40] sm:$0xff]
    %v231 = vld [vmem:[#allocation7 + $0x48] sm:$0xff]
    %v232 = vld [vmem:[#allocation7 + $0x50] sm:$0xff]
    %v233 = vld [vmem:[#allocation7 + $0x58] sm:$0xff]
    %v234 = vld [vmem:[#allocation7 + $0x60] sm:$0xff]
    %v235 = vld [vmem:[#allocation7 + $0x68] sm:$0xff]
    %v236 = vld [vmem:[#allocation7 + $0x70] sm:$0xff]
    %v237 = vld [vmem:[#allocation7 + $0x78] sm:$0xff]
    %v238 = vld [vmem:[%s4] sm:$0x1]
    %v240 = vlaneseq
    %v241 = vshrl.u32 %v240, 7
    %v242 = vsub.s32 0, %v241
    %v243 = vrot.slane %v238, %v242
    %245 = vmatprep.subr.mxu0 0.0
    %246 = vmatpush1.msra.mxu0 %v222
    %247 = vmatprep.subr.mxu0 0.0
    %248 = vmatpush1.msra.mxu0 %v223
    %249 = vmatprep.subr.mxu0 0.0
    %250 = vmatpush1.msra.mxu0 %v224
    %251 = vmatprep.subr.mxu0 0.0
    %252 = vmatpush1.msra.mxu0 %v225
    %253 = vmatprep.subr.mxu0 0.0
    %254 = vmatpush1.msra.mxu0 %v226
    %255 = vmatprep.subr.mxu0 0.0
    %256 = vmatpush1.msra.mxu0 %v227
    %257 = vmatprep.subr.mxu0 0.0
    %258 = vmatpush1.msra.mxu0 %v228
    %259 = vmatprep.subr.mxu0 0.0
    %260 = vmatpush1.msra.mxu0 %v229
    %261 = vmatprep.subr.mxu0 0.0
    %262 = vmatpush1.msra.mxu0 %v230
    %263 = vmatprep.subr.mxu0 0.0
    %264 = vmatpush1.msra.mxu0 %v231
    %265 = vmatprep.subr.mxu0 0.0
    %266 = vmatpush1.msra.mxu0 %v232
    %267 = vmatprep.subr.mxu0 0.0
    %268 = vmatpush1.msra.mxu0 %v233
    %269 = vmatprep.subr.mxu0 0.0
    %270 = vmatpush1.msra.mxu0 %v234
    %271 = vmatprep.subr.mxu0 0.0
    %272 = vmatpush1.msra.mxu0 %v235
    %273 = vmatprep.subr.mxu0 0.0
    %274 = vmatpush1.msra.mxu0 %v236
    %275 = vmatprep.subr.mxu0 0.0
    %276 = vmatpush1.msra.mxu0 %v237
    %277 = vmatprep.subr.mxu0 0.0
    %278 = vmatpush1.msra.mxu0 0.0
    %279 = vmatprep.subr.mxu0 0.0
    %280 = vmatpush1.msra.mxu0 0.0
    %281 = vmatprep.subr.mxu0 0.0
    %282 = vmatpush1.msra.mxu0 0.0
    %283 = vmatprep.subr.mxu0 0.0
    %284 = vmatpush1.msra.mxu0 0.0
    %285 = vmatprep.subr.mxu0 0.0
    %286 = vmatpush1.msra.mxu0 0.0
    %287 = vmatprep.subr.mxu0 0.0
    %288 = vmatpush1.msra.mxu0 0.0
    %289 = vmatprep.subr.mxu0 0.0
    %290 = vmatpush1.msra.mxu0 0.0
    %291 = vmatprep.subr.mxu0 0.0
    %292 = vmatpush1.msra.mxu0 0.0
    %293 = vmatprep.subr.mxu0 0.0
    %294 = vmatpush1.msra.mxu0 0.0
    %295 = vmatprep.subr.mxu0 0.0
    %296 = vmatpush1.msra.mxu0 0.0
    %297 = vmatprep.subr.mxu0 0.0
    %298 = vmatpush1.msra.mxu0 0.0
    %299 = vmatprep.subr.mxu0 0.0
    %300 = vmatpush1.msra.mxu0 0.0
    %301 = vmatprep.subr.mxu0 0.0
    %302 = vmatpush1.msra.mxu0 0.0
    %303 = vmatprep.subr.mxu0 0.0
    %304 = vmatpush1.msra.mxu0 0.0
    %305 = vmatprep.subr.mxu0 0.0
    %306 = vmatpush1.msra.mxu0 0.0
    %307 = vmatprep.subr.mxu0 0.0
    %308 = vmatpush1.msra.mxu0 0.0
    %309 = vmatprep.mubr.f32.mxu0 0.0
    %310 = vmatmul.mubr.f32.gmra.mrb[0].mxu0 %v220
    %v311 = vpop.f32.mrb[0].mxu0
    %v312 = vadd.f32 %v243, %v311
    %v313 = vpop.f32.mrb[0].mxu0
    %314 = vmatprep.mubr.f32.mxu0 0.0
    %315 = vmatmul.mubr.f32.gmra.mrb[0].mxu0 %v221
    %v316 = vpop.f32.mrb[0].mxu0
    %v317 = vadd.f32 %v243, %v316
    %v318 = vpop.f32.mrb[0].mxu0
    %319 = vdwg.mxu0
    %v320 = vadd.f32 %v312, %v68
    %v321 = vadd.f32 %v317, %v69
    %322 = vst [vmem:[#allocation8] sm:$0xff] %v320
    %323 = vst [vmem:[#allocation8 + $0x8] sm:$0xff] %v321
    // Predicated region
    $region42: #{tpu_custom_call.1} parent=1 // pred_check
      _
    $region43: #{tpu_custom_call.1} parent=1 // pred_check_branch
      %325 = sbr.rel (0) target = $region45
    $region44: #{tpu_custom_call.1} parent=1 // pred_region
      %s327 = ssub.s32 256, 256
      %328 = vsyncadd [#allocation4], %s327
      %s329 = sshll.u32 [#allocation8], 4
      %s330 = int_to_ptr.vmem [resolvable:$true] %s329
      %335 = dma.vmem_to_hbm [thread:$0]  %s330, 256, %s7, [#allocation4], 128, 128, 8
    $region45: #{tpu_custom_call.1} parent=1 // pred_fallthru
      _
    // Predicated region
    $region46: #{tpu_custom_call.1} parent=1 // pred_check
      _
    $region47: #{tpu_custom_call.1} parent=1 // pred_check_branch
      %337 = sbr.rel (0) target = $region49
    $region48: #{tpu_custom_call.1} parent=1 // pred_region
      %338 = dma.done [#allocation4], 256
    $region49: #{tpu_custom_call.1} parent=1 // pred_fallthru
      _
    %339 = vsyncpa [#allocation3], 1
    %340 = vsyncpa [#allocation6], 1
    %341 = vsyncpa [#allocation4], 1

// kernel: tpu_custom_call.1
$region0: #{tpu_custom_call.1}
  #allocation0 [shape = 'u32[]', space=smem, size = 0x4, offset = 0x4, fixed_abs, tag = 'smem constant byte address 0x4 - core index']
  #allocation1 [shape = 'u32[144,128]{1,0:T(1,128)}', space=vmem, size = 0x12000, scoped, tag = 'internal scratch']
  %s0 = inlined_call_operand.hbm [shape: f32[16,128], index: 0, kind: input, shape index: {}]
  %s1 = inlined_call_operand.hbm [shape: f32[128,128], index: 1, kind: input, shape index: {}]
  %s2 = inlined_call_operand.vmem [shape: f32[1,128], index: 2, kind: input, shape index: {}]
  %s3 = inlined_call_operand.hbm [shape: f32[128,128], index: 3, kind: input, shape index: {}]
  %s4 = inlined_call_operand.vmem [shape: f32[1,128], index: 4, kind: input, shape index: {}]
  %s5 = inlined_call_operand.vmem [shape: f32[1,128], index: 5, kind: input, shape index: {}]
  %s6 = inlined_call_operand.vmem [shape: f32[1,128], index: 6, kind: input, shape index: {}]
  %s7 = inlined_call_operand.hbm [shape: f32[16,128], index: 7, kind: output, shape index: {}]
  %s8 = sld [smem:[#allocation0]]
  $region50: #{tpu_custom_call.1} parent=0
    _
  %s10 = ssub.s32 1, %s8
  %s11 = scalar_select 0, %s10, %s8
  $region1: #{tpu_custom_call.1} parent=0
    #allocation2 [shape = 'u8[8192]{0}', space=vmem, size = 0x2000, scoped, tag = 'input window, operand 0, single buffered']
    #allocation3 [shape = 's32[1]{0}', space=sflag, size = 0x4, scoped, tag = 'scoped memory for tpu_custom_call.1']
    #allocation4 [shape = 's32[1]{0}', space=sflag, size = 0x4, scoped, tag = 'scoped memory for tpu_custom_call.1']
    #allocation5 [shape = 'u8[65536]{0}', space=vmem, size = 0x10000, scoped, tag = 'input window, operand 1, single buffered']
    #allocation6 [shape = 's32[1]{0}', space=sflag, size = 0x4, scoped, tag = 'scoped memory for tpu_custom_call.1']
    #allocation7 [shape = 'u8[65536]{0}', space=vmem, size = 0x10000, scoped, tag = 'input window, operand 3, single buffered']
    #allocation8 [shape = 'u8[8192]{0}', space=vmem, size = 0x2000, scoped, tag = 'output window, operand 0, single buffered']
    %12 = vsyncpa [#allocation3], 0
    %13 = vsyncpa [#allocation6], 0
    %14 = vsyncpa [#allocation4], 0
    // Predicated region
    $region2: #{tpu_custom_call.1} parent=1 // pred_check
      _
    $region3: #{tpu_custom_call.1} parent=1 // pred_check_branch
      %16 = sbr.rel (0) target = $region5
    $region4: #{tpu_custom_call.1} parent=1 // pred_region
      %s18 = ssub.s32 256, 256
      %19 = vsyncadd [#allocation3], %s18
      %s20 = sshll.u32 [#allocation2], 4
      %s21 = int_to_ptr.vmem [resolvable:$true] %s20
      %26 = dma.hbm_to_vmem [thread:$0]  %s0, 256, %s21, [#allocation3], 128, 128, 8
    $region5: #{tpu_custom_call.1} parent=1 // pred_fallthru
      _
    // Predicated region
    $region6: #{tpu_custom_call.1} parent=1 // pred_check
      _
    $region7: #{tpu_custom_call.1} parent=1 // pred_check_branch
      %28 = sbr.rel (0) target = $region9
    $region8: #{tpu_custom_call.1} parent=1 // pred_region
      %s30 = ssub.s32 2048, 2048
      %31 = vsyncadd [#allocation6], %s30
      %s32 = sshll.u32 [#allocation5], 4
      %s33 = int_to_ptr.vmem [resolvable:$true] %s32
      %38 = dma.hbm_to_vmem [thread:$0]  %s1, 2048, %s33, [#allocation6], 128, 128, 8
    $region9: #{tpu_custom_call.1} parent=1 // pred_fallthru
      _
    // Predicated region
    $region10: #{tpu_custom_call.1} parent=1 // pred_check
      _
    $region11: #{tpu_custom_call.1} parent=1 // pred_check_branch
      %40 = sbr.rel (0) target = $region13
    $region12: #{tpu_custom_call.1} parent=1 // pred_region
      _
    $region13: #{tpu_custom_call.1} parent=1 // pred_fallthru
      _
    // Predicated region
    $region14: #{tpu_custom_call.1} parent=1 // pred_check
      _
    $region15: #{tpu_custom_call.1} parent=1 // pred_check_branch
      %42 = sbr.rel (0) target = $region17
    $region16: #{tpu_custom_call.1} parent=1 // pred_region
      %s44 = ssub.s32 2048, 2048
      %45 = vsyncadd [#allocation6], %s44
      %s46 = sshll.u32 [#allocation7], 4
      %s47 = int_to_ptr.vmem [resolvable:$true] %s46
      %52 = dma.hbm_to_vmem [thread:$0]  %s3, 2048, %s47, [#allocation6], 128, 128, 8
    $region17: #{tpu_custom_call.1} parent=1 // pred_fallthru
      _
    // Predicated region
    $region18: #{tpu_custom_call.1} parent=1 // pred_check
      _
    $region19: #{tpu_custom_call.1} parent=1 // pred_check_branch
      %54 = sbr.rel (0) target = $region21
    $region20: #{tpu_custom_call.1} parent=1 // pred_region
      _
    $region21: #{tpu_custom_call.1} parent=1 // pred_fallthru
      _
    // Predicated region
    $region22: #{tpu_custom_call.1} parent=1 // pred_check
      _
    $region23: #{tpu_custom_call.1} parent=1 // pred_check_branch
      %56 = sbr.rel (0) target = $region25
    $region24: #{tpu_custom_call.1} parent=1 // pred_region
      _
    $region25: #{tpu_custom_call.1} parent=1 // pred_fallthru
      _
    // Predicated region
    $region26: #{tpu_custom_call.1} parent=1 // pred_check
      _
    $region27: #{tpu_custom_call.1} parent=1 // pred_check_branch
      %58 = sbr.rel (0) target = $region29
    $region28: #{tpu_custom_call.1} parent=1 // pred_region
      _
    $region29: #{tpu_custom_call.1} parent=1 // pred_fallthru
      _
    // Predicated region
    $region30: #{tpu_custom_call.1} parent=1 // pred_check
      _
    $region31: #{tpu_custom_call.1} parent=1 // pred_check_branch
      %60 = sbr.rel (0) target = $region33
    $region32: #{tpu_custom_call.1} parent=1 // pred_region
      %61 = dma.done [#allocation3], 256
    $region33: #{tpu_custom_call.1} parent=1 // pred_fallthru
      _
    // Predicated region
    $region34: #{tpu_custom_call.1} parent=1 // pred_check
      _
    $region35: #{tpu_custom_call.1} parent=1 // pred_check_branch
      %63 = sbr.rel (0) target = $region37
    $region36: #{tpu_custom_call.1} parent=1 // pred_region
      %64 = dma.done [#allocation6], 2048
    $region37: #{tpu_custom_call.1} parent=1 // pred_fallthru
      _
    // Predicated region
    $region38: #{tpu_custom_call.1} parent=1 // pred_check
      _
    $region39: #{tpu_custom_call.1} parent=1 // pred_check_branch
      %66 = sbr.rel (0) target = $region41
    $region40: #{tpu_custom_call.1} parent=1 // pred_region
      %67 = dma.done [#allocation6], 2048
    $region41: #{tpu_custom_call.1} parent=1 // pred_fallthru
      _
    %v68 = vld [vmem:[#allocation2] sm:$0xff]
    %v69 = vld [vmem:[#allocation2 + $0x8] sm:$0xff]
    %70 = vadd.xlane.f32.xlu0 %v68
    %v71 = vpop.xlane.xlu0 %70
    %72 = vadd.xlane.f32.xlu0 %v69
    %v73 = vpop.xlane.xlu0 %72
    %v74 = vmul.f32 %v71, 0.03125
    %v75 = vmul.f32 %v73, 0.03125
    %v76 = vmul.f32 %v68, %v68
    %v77 = vmul.f32 %v69, %v69
    %78 = vadd.xlane.f32.xlu0 %v76
    %v79 = vpop.xlane.xlu0 %78
    %80 = vadd.xlane.f32.xlu0 %v77
    %v81 = vpop.xlane.xlu0 %80
    %v82 = vmul.f32 %v79, 0.03125
    %v83 = vmul.f32 %v81, 0.03125
    %v84 = vmul.f32 %v74, %v74
    %v85 = vmul.f32 %v75, %v75
    %v86 = vsub.f32 %v82, %v84
    %v87 = vsub.f32 %v83, %v85
    %v88 = vsub.f32 %v68, %v74
    %v89 = vsub.f32 %v69, %v75
    %v90 = vadd.f32 %v86, 1e-06
    %v91 = vadd.f32 %v87, 1e-06
    %v92 = vrsqrt.pop %v90
    %v93 = vrsqrt.pop %v91
    %v94 = vmul.f32 %v88, %v92
    %v95 = vmul.f32 %v89, %v93
    %v96 = vld [vmem:[%s5] sm:$0x1]
    %v98 = vlaneseq
    %v99 = vshrl.u32 %v98, 7
    %v100 = vsub.s32 0, %v99
    %v101 = vrot.slane %v96, %v100
    %v103 = vmul.f32 %v94, %v101
    %v104 = vmul.f32 %v95, %v101
    %v105 = vld [vmem:[%s6] sm:$0x1]
    %v107 = vlaneseq
    %v108 = vshrl.u32 %v107, 7
    %v109 = vsub.s32 0, %v108
    %v110 = vrot.slane %v105, %v109
    %v112 = vadd.f32 %v103, %v110
    %v113 = vadd.f32 %v104, %v110
    %v114 = vld [vmem:[#allocation5] sm:$0xff]
    %v115 = vld [vmem:[#allocation5 + $0x8] sm:$0xff]
    %v116 = vld [vmem:[#allocation5 + $0x10] sm:$0xff]
    %v117 = vld [vmem:[#allocation5 + $0x18] sm:$0xff]
    %v118 = vld [vmem:[#allocation5 + $0x20] sm:$0xff]
    %v119 = vld [vmem:[#allocation5 + $0x28] sm:$0xff]
    %v120 = vld [vmem:[#allocation5 + $0x30] sm:$0xff]
    %v121 = vld [vmem:[#allocation5 + $0x38] sm:$0xff]
    %v122 = vld [vmem:[#allocation5 + $0x40] sm:$0xff]
    %v123 = vld [vmem:[#allocation5 + $0x48] sm:$0xff]
    %v124 = vld [vmem:[#allocation5 + $0x50] sm:$0xff]
    %v125 = vld [vmem:[#allocation5 + $0x58] sm:$0xff]
    %v126 = vld [vmem:[#allocation5 + $0x60] sm:$0xff]
    %v127 = vld [vmem:[#allocation5 + $0x68] sm:$0xff]
    %v128 = vld [vmem:[#allocation5 + $0x70] sm:$0xff]
    %v129 = vld [vmem:[#allocation5 + $0x78] sm:$0xff]
    %v130 = vld [vmem:[%s2] sm:$0x1]
    %v132 = vlaneseq
    %v133 = vshrl.u32 %v132, 7
    %v134 = vsub.s32 0, %v133
    %v135 = vrot.slane %v130, %v134
    %137 = vmatprep.subr.mxu0 0.0
    %138 = vmatpush1.msra.mxu0 %v114
    %139 = vmatprep.subr.mxu0 0.0
    %140 = vmatpush1.msra.mxu0 %v115
    %141 = vmatprep.subr.mxu0 0.0
    %142 = vmatpush1.msra.mxu0 %v116
    %143 = vmatprep.subr.mxu0 0.0
    %144 = vmatpush1.msra.mxu0 %v117
    %145 = vmatprep.subr.mxu0 0.0
    %146 = vmatpush1.msra.mxu0 %v118
    %147 = vmatprep.subr.mxu0 0.0
    %148 = vmatpush1.msra.mxu0 %v119
    %149 = vmatprep.subr.mxu0 0.0
    %150 = vmatpush1.msra.mxu0 %v120
    %151 = vmatprep.subr.mxu0 0.0
    %152 = vmatpush1.msra.mxu0 %v121
    %153 = vmatprep.subr.mxu0 0.0
    %154 = vmatpush1.msra.mxu0 %v122
    %155 = vmatprep.subr.mxu0 0.0
    %156 = vmatpush1.msra.mxu0 %v123
    %157 = vmatprep.subr.mxu0 0.0
    %158 = vmatpush1.msra.mxu0 %v124
    %159 = vmatprep.subr.mxu0 0.0
    %160 = vmatpush1.msra.mxu0 %v125
    %161 = vmatprep.subr.mxu0 0.0
    %162 = vmatpush1.msra.mxu0 %v126
    %163 = vmatprep.subr.mxu0 0.0
    %164 = vmatpush1.msra.mxu0 %v127
    %165 = vmatprep.subr.mxu0 0.0
    %166 = vmatpush1.msra.mxu0 %v128
    %167 = vmatprep.subr.mxu0 0.0
    %168 = vmatpush1.msra.mxu0 %v129
    %169 = vmatprep.subr.mxu0 0.0
    %170 = vmatpush1.msra.mxu0 0.0
    %171 = vmatprep.subr.mxu0 0.0
    %172 = vmatpush1.msra.mxu0 0.0
    %173 = vmatprep.subr.mxu0 0.0
    %174 = vmatpush1.msra.mxu0 0.0
    %175 = vmatprep.subr.mxu0 0.0
    %176 = vmatpush1.msra.mxu0 0.0
    %177 = vmatprep.subr.mxu0 0.0
    %178 = vmatpush1.msra.mxu0 0.0
    %179 = vmatprep.subr.mxu0 0.0
    %180 = vmatpush1.msra.mxu0 0.0
    %181 = vmatprep.subr.mxu0 0.0
    %182 = vmatpush1.msra.mxu0 0.0
    %183 = vmatprep.subr.mxu0 0.0
    %184 = vmatpush1.msra.mxu0 0.0
    %185 = vmatprep.subr.mxu0 0.0
    %186 = vmatpush1.msra.mxu0 0.0
    %187 = vmatprep.subr.mxu0 0.0
    %188 = vmatpush1.msra.mxu0 0.0
    %189 = vmatprep.subr.mxu0 0.0
    %190 = vmatpush1.msra.mxu0 0.0
    %191 = vmatprep.subr.mxu0 0.0
    %192 = vmatpush1.msra.mxu0 0.0
    %193 = vmatprep.subr.mxu0 0.0
    %194 = vmatpush1.msra.mxu0 0.0
    %195 = vmatprep.subr.mxu0 0.0
    %196 = vmatpush1.msra.mxu0 0.0
    %197 = vmatprep.subr.mxu0 0.0
    %198 = vmatpush1.msra.mxu0 0.0
    %199 = vmatprep.subr.mxu0 0.0
    %200 = vmatpush1.msra.mxu0 0.0
    %201 = vmatprep.mubr.f32.mxu0 0.0
    %202 = vmatmul.mubr.f32.gmra.mrb[0].mxu0 %v112
    %v203 = vpop.f32.mrb[0].mxu0
    %v204 = vadd.f32 %v135, %v203
    %v205 = vpop.f32.mrb[0].mxu0
    %206 = vmatprep.mubr.f32.mxu0 0.0
    %207 = vmatmul.mubr.f32.gmra.mrb[0].mxu0 %v113
    %v208 = vpop.f32.mrb[0].mxu0
    %v209 = vadd.f32 %v135, %v208
    %v210 = vpop.f32.mrb[0].mxu0
    %211 = vdwg.mxu0
    %v212 = vmul.f32 %v204, 0.5
    %v213 = vmul.f32 %v209, 0.5
    %v214 = vmul.f32 %v204, 0.70710677
    %v215 = vmul.f32 %v209, 0.70710677
    %v216 = verf.f32.pop %v214
    %v217 = verf.f32.pop %v215
    %v218 = vadd.f32 %v216, 1.0
    %v219 = vadd.f32 %v217, 1.0
    %v220 = vmul.f32 %v212, %v218
    %v221 = vmul.f32 %v213, %v219
    %v222 = vld [vmem:[#allocation7] sm:$0xff]
    %v223 = vld [vmem:[#allocation7 + $0x8] sm:$0xff]
    %v224 = vld [vmem:[#allocation7 + $0x10] sm:$0xff]
    %v225 = vld [vmem:[#allocation7 + $0x18] sm:$0xff]
    %v226 = vld [vmem:[#allocation7 + $0x20] sm:$0xff]
    %v227 = vld [vmem:[#allocation7 + $0x28] sm:$0xff]
    %v228 = vld [vmem:[#allocation7 + $0x30] sm:$0xff]
    %v229 = vld [vmem:[#allocation7 + $0x38] sm:$0xff]
    %v230 = vld [vmem:[#allocation7 + $0x40] sm:$0xff]
    %v231 = vld [vmem:[#allocation7 + $0x48] sm:$0xff]
    %v232 = vld [vmem:[#allocation7 + $0x50] sm:$0xff]
    %v233 = vld [vmem:[#allocation7 + $0x58] sm:$0xff]
    %v234 = vld [vmem:[#allocation7 + $0x60] sm:$0xff]
    %v235 = vld [vmem:[#allocation7 + $0x68] sm:$0xff]
    %v236 = vld [vmem:[#allocation7 + $0x70] sm:$0xff]
    %v237 = vld [vmem:[#allocation7 + $0x78] sm:$0xff]
    %v238 = vld [vmem:[%s4] sm:$0x1]
    %v240 = vlaneseq
    %v241 = vshrl.u32 %v240, 7
    %v242 = vsub.s32 0, %v241
    %v243 = vrot.slane %v238, %v242
    %245 = vmatprep.subr.mxu0 0.0
    %246 = vmatpush1.msra.mxu0 %v222
    %247 = vmatprep.subr.mxu0 0.0
    %248 = vmatpush1.msra.mxu0 %v223
    %249 = vmatprep.subr.mxu0 0.0
    %250 = vmatpush1.msra.mxu0 %v224
    %251 = vmatprep.subr.mxu0 0.0
    %252 = vmatpush1.msra.mxu0 %v225
    %253 = vmatprep.subr.mxu0 0.0
    %254 = vmatpush1.msra.mxu0 %v226
    %255 = vmatprep.subr.mxu0 0.0
    %256 = vmatpush1.msra.mxu0 %v227
    %257 = vmatprep.subr.mxu0 0.0
    %258 = vmatpush1.msra.mxu0 %v228
    %259 = vmatprep.subr.mxu0 0.0
    %260 = vmatpush1.msra.mxu0 %v229
    %261 = vmatprep.subr.mxu0 0.0
    %262 = vmatpush1.msra.mxu0 %v230
    %263 = vmatprep.subr.mxu0 0.0
    %264 = vmatpush1.msra.mxu0 %v231
    %265 = vmatprep.subr.mxu0 0.0
    %266 = vmatpush1.msra.mxu0 %v232
    %267 = vmatprep.subr.mxu0 0.0
    %268 = vmatpush1.msra.mxu0 %v233
    %269 = vmatprep.subr.mxu0 0.0
    %270 = vmatpush1.msra.mxu0 %v234
    %271 = vmatprep.subr.mxu0 0.0
    %272 = vmatpush1.msra.mxu0 %v235
    %273 = vmatprep.subr.mxu0 0.0
    %274 = vmatpush1.msra.mxu0 %v236
    %275 = vmatprep.subr.mxu0 0.0
    %276 = vmatpush1.msra.mxu0 %v237
    %277 = vmatprep.subr.mxu0 0.0
    %278 = vmatpush1.msra.mxu0 0.0
    %279 = vmatprep.subr.mxu0 0.0
    %280 = vmatpush1.msra.mxu0 0.0
    %281 = vmatprep.subr.mxu0 0.0
    %282 = vmatpush1.msra.mxu0 0.0
    %283 = vmatprep.subr.mxu0 0.0
    %284 = vmatpush1.msra.mxu0 0.0
    %285 = vmatprep.subr.mxu0 0.0
    %286 = vmatpush1.msra.mxu0 0.0
    %287 = vmatprep.subr.mxu0 0.0
    %288 = vmatpush1.msra.mxu0 0.0
    %289 = vmatprep.subr.mxu0 0.0
    %290 = vmatpush1.msra.mxu0 0.0
    %291 = vmatprep.subr.mxu0 0.0
    %292 = vmatpush1.msra.mxu0 0.0
    %293 = vmatprep.subr.mxu0 0.0
    %294 = vmatpush1.msra.mxu0 0.0
    %295 = vmatprep.subr.mxu0 0.0
    %296 = vmatpush1.msra.mxu0 0.0
    %297 = vmatprep.subr.mxu0 0.0
    %298 = vmatpush1.msra.mxu0 0.0
    %299 = vmatprep.subr.mxu0 0.0
    %300 = vmatpush1.msra.mxu0 0.0
    %301 = vmatprep.subr.mxu0 0.0
    %302 = vmatpush1.msra.mxu0 0.0
    %303 = vmatprep.subr.mxu0 0.0
    %304 = vmatpush1.msra.mxu0 0.0
    %305 = vmatprep.subr.mxu0 0.0
    %306 = vmatpush1.msra.mxu0 0.0
    %307 = vmatprep.subr.mxu0 0.0
    %308 = vmatpush1.msra.mxu0 0.0
    %309 = vmatprep.mubr.f32.mxu0 0.0
    %310 = vmatmul.mubr.f32.gmra.mrb[0].mxu0 %v220
    %v311 = vpop.f32.mrb[0].mxu0
    %v312 = vadd.f32 %v243, %v311
    %v313 = vpop.f32.mrb[0].mxu0
    %314 = vmatprep.mubr.f32.mxu0 0.0
    %315 = vmatmul.mubr.f32.gmra.mrb[0].mxu0 %v221
    %v316 = vpop.f32.mrb[0].mxu0
    %v317 = vadd.f32 %v243, %v316
    %v318 = vpop.f32.mrb[0].mxu0
    %319 = vdwg.mxu0
    %v320 = vadd.f32 %v312, %v68
    %v321 = vadd.f32 %v317, %v69
    %322 = vst [vmem:[#allocation8] sm:$0xff] %v320
    %323 = vst [vmem:[#allocation8 + $0x8] sm:$0xff] %v321
    // Predicated region
    $region42: #{tpu_custom_call.1} parent=1 // pred_check
      _
    $region43: #{tpu_custom_call.1} parent=1 // pred_check_branch
      %325 = sbr.rel (0) target = $region45
    $region44: #{tpu_custom_call.1} parent=1 // pred_region
      %s327 = ssub.s32 256, 256
      %328 = vsyncadd [#allocation4], %s327
      %s329 = sshll.u32 [#allocation8], 4
      %s330 = int_to_ptr.vmem [resolvable:$true] %s329
      %335 = dma.vmem_to_hbm [thread:$0]  %s330, 256, %s7, [#allocation4], 128, 128, 8
    $region45: #{tpu_custom_call.1} parent=1 // pred_fallthru
      _
    // Predicated region
    $region46: #{tpu_custom_call.1} parent=1 // pred_check
      _
    $region47: #{tpu_custom_call.1} parent=1 // pred_check_branch
      %337 = sbr.rel (0) target = $region49
    $region48: #{tpu_custom_call.1} parent=1 // pred_region
      %338 = dma.done [#allocation4], 256
    $region49: #{tpu_custom_call.1} parent=1 // pred_fallthru
      _
    %339 = vsyncpa [#allocation3], 1
    %340 = vsyncpa [#allocation6], 1
    %341 = vsyncpa [#allocation4], 1

</llo_original>
